<compile_context>
chip_gen: v7x
topology: tpu7x:2x2x1
jax: 0.10.0
libtpu: 0.0.40
codegen_flags: <defaults>
</compile_context>

<pallas_src>
import functools

import jax
import jax.numpy as jnp
from jax.experimental import pallas as pl
from jax.experimental.pallas import tpu as pltpu

_LANE = 128
_VMEM_BUDGET = 40 * 1024 * 1024      # conservative: fits v7x (64 MiB physical)


def _round_up(n, m):
    return ((n + m - 1) // m) * m


def _projector_kernel(num_hidden, x_ref, stats_ref, wfirst_ref, wrest_ref,
                      bias_ref, out_ref):
    """x_ref:     (Bt, KXp)               flattened (W*E) window, zero-padded K
       stats_ref: (Bt, 128)               zero-padded stats
       wfirst_ref:(KXp, 128)              fused (circular-conv o first Linear)
       wrest_ref: (num_hidden+1,128,128)  [W_stats, W1..W_{nh-1}, W_out], padded
       bias_ref:  (num_hidden, 1, 128)    f32 biases, zero-padded
       out_ref:   (Bt, 128)               lane-dense output (sliced in wrapper)."""
    # First layer: fused-conv dot + stats dot + bias, ReLU.  All MXU work.
    h = jnp.dot(x_ref[...], wfirst_ref[...], preferred_element_type=jnp.float32)
    h = h + jnp.dot(stats_ref[...], wrest_ref[0],
                    preferred_element_type=jnp.float32)
    h = jnp.maximum(h + bias_ref[0], 0.0)

    # Remaining hidden layers (static unroll).
    for i in range(1, num_hidden):
        h = jnp.dot(h.astype(wrest_ref.dtype), wrest_ref[i],
                    preferred_element_type=jnp.float32) + bias_ref[i]
        h = jnp.maximum(h, 0.0)

    # Final bias-free Linear.
    y = jnp.dot(h.astype(wrest_ref.dtype), wrest_ref[num_hidden],
                preferred_element_type=jnp.float32)
    out_ref[...] = y.astype(out_ref.dtype)


def prepare_projector_params(conv_w, mlp_params, win_size, enc_in, *,
                             param_dtype=jnp.bfloat16):
    """Pre-compose conv o first-Linear and pack all weights once (call at init).

    conv_w: (win_size, kernel_size) Conv1d weight (out_channels == 1, no bias).
    mlp_params: [(w0, b0), (w1, b1), ..., w_out] with weights stored (in, out).
    """
    P = _LANE
    W, E = win_size, enc_in
    KX = W * E
    KXp = _round_up(KX, P)
    ksz = conv_w.shape[1]
    # padding=1 + circular keeps length == enc_in only for kernel_size == 3
    # (matches the PyTorch module's default construction).
    assert ksz == 3, "fusion assumes Conv1d(kernel_size=3, padding=1, circular)"
    assert E <= P, "enc_in > 128 would need lane tiling of the stats slab"

    w0, b0 = mlp_params[0]
    H0 = w0.shape[1]
    assert H0 <= P, "hidden dims > 128 would need lane tiling"
    w0_conv = w0[:E].astype(jnp.float32)      # acts on the conv output
    w0_stats = w0[E:].astype(jnp.float32)     # acts on stats

    # conv[b, e] = sum_{c,k} x[b, c, (e + k - 1) % E] * cw[c, k]
    # => (conv @ w0_conv)[b, h] = x_flat[b, :] @ W_fused[:, h]   with
    #    W_fused[c*E + e, h] = sum_k cw[c, k] * w0_conv[(e + 1 - k) % E, h]
    fused = jnp.zeros((W, E, H0), jnp.float32)
    for k in range(ksz):
        rolled = jnp.roll(w0_conv, shift=k - 1, axis=0)       # [(e+1-k) % E]
        fused = fused + conv_w[:, k].astype(jnp.float32)[:, None, None] * rolled[None]
    w_first = jnp.zeros((KXp, P), jnp.float32).at[:KX, :H0].set(
        fused.reshape(KX, H0))

    def _pad2(w):
        assert w.shape[0] <= P and w.shape[1] <= P, "dims > 128 need tiling"
        return jnp.zeros((P, P), jnp.float32).at[:w.shape[0], :w.shape[1]].set(
            w.astype(jnp.float32))

    def _padb(b, width):
        return jnp.zeros((1, P), jnp.float32).at[:, :width].set(
            b.astype(jnp.float32).reshape(1, -1))

    rest = [_pad2(w0_stats)]
    biases = [_padb(b0, H0)]
    for wi, bi in mlp_params[1:-1]:
        rest.append(_pad2(wi))
        biases.append(_padb(bi, wi.shape[1]))
    rest.append(_pad2(mlp_params[-1]))        # bias-free output layer

    return dict(
        w_first=w_first.astype(param_dtype),            # (KXp, 128)
        w_rest=jnp.stack(rest).astype(param_dtype),      # (num_hidden+1,128,128)
        b_slab=jnp.stack(biases),                        # (num_hidden,1,128) f32
        num_hidden=len(mlp_params) - 1,
        win_size=W,
        enc_in=E,
        param_dtype=param_dtype,
    )


def projector_forward(x, stats, params, output_dim, *, batch_tile=256):
    """x: (B, win_size, enc_in), stats: (B, 1, enc_in) -> (B, output_dim)."""
    B, W, E = x.shape
    assert W == params["win_size"] and E == params["enc_in"]
    assert output_dim <= _LANE, "output_dim > 128 would need lane tiling"
    P = _LANE
    KX = W * E
    KXp = params["w_first"].shape[0]
    num_hidden = params["num_hidden"]
    num_rest = num_hidden + 1
    act_dtype = params["param_dtype"]
    isz = jnp.dtype(act_dtype).itemsize

    # ---------------- batch tile selection -----------------------------------
    bp0 = _round_up(B, 8)
    btile = max(8, min(_round_up(batch_tile, 8), bp0))
    # v7x has 2 TensorCores: keep >=2 grid steps (sharded via "parallel") when
    # the batch allows an exact 2-way split (no extra padding on v5e/v6e).
    if bp0 // btile < 2 and bp0 >= 16 and bp0 % 16 == 0:
        btile = bp0 // 2

    def footprint(bt):
        # worst case: double-buffered x/stats/out, double-buffered weights too
        # (in case the Buffered(1) request is rejected and we fall back).
        return (2 * bt * (KXp + P) * isz
                + 2 * (KXp * P + num_rest * P * P) * isz
                + num_hidden * P * 4
                + 2 * bt * P * 4)

    while footprint(btile) > _VMEM_BUDGET and btile > 8:
        btile = max(8, _round_up(btile // 2, 8))
    bp = _round_up(bp0, btile)

    # ---------------- activation prep (no HBM copy when already aligned) -----
    x_flat = x.reshape(B, KX)
    if x_flat.dtype != act_dtype:
        x_flat = x_flat.astype(act_dtype)
    if bp != B or KXp != KX:
        x_flat = jnp.pad(x_flat, ((0, bp - B), (0, KXp - KX)))
    stats_2d = stats.reshape(B, E)
    if stats_2d.dtype != act_dtype:
        stats_2d = stats_2d.astype(act_dtype)
    if bp != B or E != P:
        stats_2d = jnp.pad(stats_2d, ((0, bp - B), (0, P - E)))

    grid = (bp // btile,)
    cost = pl.CostEstimate(
        flops=2 * bp * KXp * P + 2 * bp * P * P * num_rest,
        transcendentals=0,
        bytes_accessed=(bp * (KXp + P) * isz
                        + (KXp * P + num_rest * P * P) * isz
                        + num_hidden * P * 4 + bp * P * 4))
    cparams = pltpu.CompilerParams(
        dimension_semantics=("parallel",),
        vmem_limit_bytes=min(48 * 1024 * 1024,
                             max(32 * 1024 * 1024, footprint(btile) + (8 << 20))))

    def build(single_buffer_weights):
        wmode = (dict(pipeline_mode=pl.Buffered(1))
                 if single_buffer_weights else {})
        return pl.pallas_call(
            functools.partial(_projector_kernel, num_hidden),
            out_shape=jax.ShapeDtypeStruct((bp, P), jnp.float32),
            grid=grid,
            in_specs=[
                pl.BlockSpec((btile, KXp), lambda b: (b, 0)),
                pl.BlockSpec((btile, P), lambda b: (b, 0)),
                pl.BlockSpec((KXp, P), lambda b: (0, 0), **wmode),
                pl.BlockSpec((num_rest, P, P), lambda b: (0, 0, 0), **wmode),
                pl.BlockSpec((num_hidden, 1, P), lambda b: (0, 0, 0), **wmode),
            ],
            out_specs=pl.BlockSpec((btile, P), lambda b: (b, 0)),
            compiler_params=cparams,
            cost_estimate=cost,
        )

    args = (x_flat, stats_2d, params["w_first"], params["w_rest"],
            params["b_slab"])
    try:
        out = build(True)(*args)
    except Exception:
        # Fallback for Pallas versions that reject single-buffered weight specs.
        out = build(False)(*args)

    return out[:B, :output_dim]


def _reference(x, stats, conv_w, mlp_params):
    """Pure-JAX reference matching the PyTorch Projector semantics."""
    B, W, E = x.shape
    xp = jnp.concatenate([x[:, :, -1:], x, x[:, :, :1]], axis=-1)  # circular pad 1
    conv = jnp.zeros((B, E), jnp.float32)
    for k in range(conv_w.shape[1]):
        conv = conv + jnp.einsum("bce,c->be", xp[:, :, k:k + E], conv_w[:, k])
    feat = jnp.concatenate([conv, stats[:, 0, :]], axis=-1)
    h = feat
    for wi, bi in mlp_params[:-1]:
        h = jnp.maximum(h @ wi + bi, 0.0)
    return h @ mlp_params[-1]


if __name__ == "__main__":
    # Small shapes consistent with the module.
    B = 2            # batch
    win_size = 8     # Conv1d in_channels
    enc_in = 16      # Conv1d length / series features (W*E = 128 lane-aligned)
    hidden_dims = [32, 32]
    hidden_layers = 2
    output_dim = 16
    kernel_size = 3

    key = jax.random.PRNGKey(0)
    keys = jax.random.split(key, 16)

    x = jax.random.normal(keys[0], (B, win_size, enc_in), jnp.float32)
    stats = jax.random.normal(keys[1], (B, 1, enc_in), jnp.float32)

    # Synthetic parameters (series_conv weight stored (win_size, kernel_size)).
    conv_w = 0.1 * jax.random.normal(keys[2], (win_size, kernel_size), jnp.float32)

    dims = [2 * enc_in] + list(hidden_dims)
    mlp_params = []
    kidx = 3
    for i in range(hidden_layers):
        wi = 0.1 * jax.random.normal(keys[kidx], (dims[i], dims[i + 1]), jnp.float32)
        bi = 0.05 * jax.random.normal(keys[kidx + 1], (1, dims[i + 1]), jnp.float32)
        mlp_params.append((wi, bi))
        kidx += 2
    w_out = 0.1 * jax.random.normal(keys[kidx], (dims[-1], output_dim), jnp.float32)
    mlp_params.append(w_out)

    y_ref = _reference(x, stats, conv_w, mlp_params)

    # f32 parameter path: bit-for-bit-ish check against the reference.
    params_f32 = prepare_projector_params(conv_w, mlp_params, win_size, enc_in,
                                          param_dtype=jnp.float32)
    y32 = jax.block_until_ready(projector_forward(x, stats, params_f32, output_dim))
    assert y32.shape == (B, output_dim)
    assert jnp.allclose(y32, y_ref, atol=1e-4, rtol=1e-3), "f32 mismatch vs reference"

    # Default bf16 path (halves the HBM-bound x stream; f32 MXU accumulation).
    params_bf16 = prepare_projector_params(conv_w, mlp_params, win_size, enc_in)
    y16 = jax.block_until_ready(projector_forward(x, stats, params_bf16, output_dim))
    assert y16.shape == (B, output_dim)
    assert jnp.allclose(y16, y_ref, atol=3e-2, rtol=5e-2), "bf16 mismatch vs reference"

    print("KERNEL_OK")
</pallas_src>

<mosaic_0001>
module attributes {stable_mosaic.version = 11 : i64} {
  func.func @_projector_kernel(%arg0: i32, %arg1: memref<8x128xf32, #tpu.memory_space<vmem>>, %arg2: memref<8x128xf32, #tpu.memory_space<vmem>>, %arg3: memref<128x128xf32, #tpu.memory_space<vmem>>, %arg4: memref<3x128x128xf32, #tpu.memory_space<vmem>>, %arg5: memref<2x1x128xf32, #tpu.memory_space<vmem>>, %arg6: memref<8x128xf32, #tpu.memory_space<vmem>>) attributes {dimension_semantics = [#tpu.dimension_semantics<parallel>], iteration_bounds = array<i64: 1>, scalar_prefetch = 0 : i64, scratch_operands = 0 : i64, tpu.core_type = #tpu.core_type<tc>, window_params = [{transform_indices = @transform_0, window_bounds = array<i64: 8, 128>}, {transform_indices = @transform_1, window_bounds = array<i64: 8, 128>}, {pipeline_mode = #tpu.pipeline_mode<synchronous>, transform_indices = @transform_2, window_bounds = array<i64: 128, 128>}, {pipeline_mode = #tpu.pipeline_mode<synchronous>, transform_indices = @transform_3, window_bounds = array<i64: 3, 128, 128>}, {pipeline_mode = #tpu.pipeline_mode<synchronous>, transform_indices = @transform_4, window_bounds = array<i64: 2, 1, 128>}, {transform_indices = @transform_5, window_bounds = array<i64: 8, 128>}]} {
    %c0 = arith.constant 0 : index
    %c0_0 = arith.constant 0 : index
    %0 = vector.load %arg1[%c0, %c0_0] : memref<8x128xf32, #tpu.memory_space<vmem>>, vector<8x128xf32>
    %c0_1 = arith.constant 0 : index
    %c0_2 = arith.constant 0 : index
    %1 = vector.load %arg3[%c0_1, %c0_2] : memref<128x128xf32, #tpu.memory_space<vmem>>, vector<128x128xf32>
    %cst = arith.constant dense<0.000000e+00> : vector<8x128xf32>
    %2 = tpu.matmul %0, %1, %cst {dimension_numbers = #tpu.dot_dimension_numbers<[1], [0], [0], [1], [0, 0, 1, 1], [], []>} : vector<8x128xf32>, vector<128x128xf32>, vector<8x128xf32> -> vector<8x128xf32>
    %c0_3 = arith.constant 0 : index
    %c0_4 = arith.constant 0 : index
    %3 = vector.load %arg2[%c0_3, %c0_4] : memref<8x128xf32, #tpu.memory_space<vmem>>, vector<8x128xf32>
    %c0_5 = arith.constant 0 : index
    %c0_6 = arith.constant 0 : index
    %c0_7 = arith.constant 0 : index
    %4 = vector.load %arg4[%c0_5, %c0_6, %c0_7] : memref<3x128x128xf32, #tpu.memory_space<vmem>>, vector<1x128x128xf32>
    %5 = vector.shape_cast %4 : vector<1x128x128xf32> to vector<128x128xf32>
    %cst_8 = arith.constant dense<0.000000e+00> : vector<8x128xf32>
    %6 = tpu.matmul %3, %5, %cst_8 {dimension_numbers = #tpu.dot_dimension_numbers<[1], [0], [0], [1], [0, 0, 1, 1], [], []>} : vector<8x128xf32>, vector<128x128xf32>, vector<8x128xf32> -> vector<8x128xf32>
    %7 = arith.addf %2, %6 : vector<8x128xf32>
    %c0_9 = arith.constant 0 : index
    %c0_10 = arith.constant 0 : index
    %c0_11 = arith.constant 0 : index
    %8 = vector.load %arg5[%c0_9, %c0_10, %c0_11] : memref<2x1x128xf32, #tpu.memory_space<vmem>>, vector<1x1x128xf32>
    %9 = vector.shape_cast %8 : vector<1x1x128xf32> to vector<1x128xf32>
    %10 = vector.broadcast %9 : vector<1x128xf32> to vector<8x128xf32>
    %11 = arith.addf %7, %10 : vector<8x128xf32>
    %cst_12 = arith.constant 0.000000e+00 : f32
    %12 = vector.broadcast %cst_12 : f32 to vector<8x128xf32>
    %13 = arith.maximumf %11, %12 : vector<8x128xf32>
    %c1 = arith.constant 1 : index
    %c0_13 = arith.constant 0 : index
    %c0_14 = arith.constant 0 : index
    %14 = vector.load %arg4[%c1, %c0_13, %c0_14] : memref<3x128x128xf32, #tpu.memory_space<vmem>>, vector<1x128x128xf32>
    %15 = vector.shape_cast %14 : vector<1x128x128xf32> to vector<128x128xf32>
    %cst_15 = arith.constant dense<0.000000e+00> : vector<8x128xf32>
    %16 = tpu.matmul %13, %15, %cst_15 {dimension_numbers = #tpu.dot_dimension_numbers<[1], [0], [0], [1], [0, 0, 1, 1], [], []>} : vector<8x128xf32>, vector<128x128xf32>, vector<8x128xf32> -> vector<8x128xf32>
    %c1_16 = arith.constant 1 : index
    %c0_17 = arith.constant 0 : index
    %c0_18 = arith.constant 0 : index
    %17 = vector.load %arg5[%c1_16, %c0_17, %c0_18] : memref<2x1x128xf32, #tpu.memory_space<vmem>>, vector<1x1x128xf32>
    %18 = vector.shape_cast %17 : vector<1x1x128xf32> to vector<1x128xf32>
    %19 = vector.broadcast %18 : vector<1x128xf32> to vector<8x128xf32>
    %20 = arith.addf %16, %19 : vector<8x128xf32>
    %cst_19 = arith.constant 0.000000e+00 : f32
    %21 = vector.broadcast %cst_19 : f32 to vector<8x128xf32>
    %22 = arith.maximumf %20, %21 : vector<8x128xf32>
    %c2 = arith.constant 2 : index
    %c0_20 = arith.constant 0 : index
    %c0_21 = arith.constant 0 : index
    %23 = vector.load %arg4[%c2, %c0_20, %c0_21] : memref<3x128x128xf32, #tpu.memory_space<vmem>>, vector<1x128x128xf32>
    %24 = vector.shape_cast %23 : vector<1x128x128xf32> to vector<128x128xf32>
    %cst_22 = arith.constant dense<0.000000e+00> : vector<8x128xf32>
    %25 = tpu.matmul %22, %24, %cst_22 {dimension_numbers = #tpu.dot_dimension_numbers<[1], [0], [0], [1], [0, 0, 1, 1], [], []>} : vector<8x128xf32>, vector<128x128xf32>, vector<8x128xf32> -> vector<8x128xf32>
    %c0_23 = arith.constant 0 : index
    %c0_24 = arith.constant 0 : index
    %26 = vector.load %arg6[%c0_23, %c0_24] : memref<8x128xf32, #tpu.memory_space<vmem>>, vector<8x128xf32>
    tpu.vector_store %arg6[%c0_23, %c0_24], %25 {strides = array<i32>} : memref<8x128xf32, #tpu.memory_space<vmem>>, vector<8x128xf32>,
    return
  }
  func.func @transform_0(%arg0: i32) -> (i32, i32) {
    %c0_i32 = arith.constant 0 : i32
    %c0_i32_0 = arith.constant 0 : i32
    return %arg0, %c0_i32 : i32, i32
  }
  func.func @transform_1(%arg0: i32) -> (i32, i32) {
    %c0_i32 = arith.constant 0 : i32
    %c0_i32_0 = arith.constant 0 : i32
    return %arg0, %c0_i32 : i32, i32
  }
  func.func @transform_2(%arg0: i32) -> (i32, i32) {
    %c0_i32 = arith.constant 0 : i32
    %c0_i32_0 = arith.constant 0 : i32
    %c0_i32_1 = arith.constant 0 : i32
    return %c0_i32, %c0_i32_0 : i32, i32
  }
  func.func @transform_3(%arg0: i32) -> (i32, i32, i32) {
    %c0_i32 = arith.constant 0 : i32
    %c0_i32_0 = arith.constant 0 : i32
    %c0_i32_1 = arith.constant 0 : i32
    %c0_i32_2 = arith.constant 0 : i32
    return %c0_i32, %c0_i32_0, %c0_i32_1 : i32, i32, i32
  }
  func.func @transform_4(%arg0: i32) -> (i32, i32, i32) {
    %c0_i32 = arith.constant 0 : i32
    %c0_i32_0 = arith.constant 0 : i32
    %c0_i32_1 = arith.constant 0 : i32
    %c0_i32_2 = arith.constant 0 : i32
    return %c0_i32, %c0_i32_0, %c0_i32_1 : i32, i32, i32
  }
  func.func @transform_5(%arg0: i32) -> (i32, i32) {
    %c0_i32 = arith.constant 0 : i32
    %c0_i32_0 = arith.constant 0 : i32
    return %arg0, %c0_i32 : i32, i32
  }
}

module attributes {stable_mosaic.version = 11 : i64} {
  func.func @_projector_kernel(%arg0: i32, %arg1: memref<8x128xf32, #tpu.memory_space<vmem>>, %arg2: memref<8x128xf32, #tpu.memory_space<vmem>>, %arg3: memref<128x128xf32, #tpu.memory_space<vmem>>, %arg4: memref<3x128x128xf32, #tpu.memory_space<vmem>>, %arg5: memref<2x1x128xf32, #tpu.memory_space<vmem>>, %arg6: memref<8x128xf32, #tpu.memory_space<vmem>>) attributes {dimension_semantics = [#tpu.dimension_semantics<parallel>], iteration_bounds = array<i64: 1>, scalar_prefetch = 0 : i64, scratch_operands = 0 : i64, tpu.core_type = #tpu.core_type<tc>, window_params = [{transform_indices = @transform_0, window_bounds = array<i64: 8, 128>}, {transform_indices = @transform_1, window_bounds = array<i64: 8, 128>}, {pipeline_mode = #tpu.pipeline_mode<synchronous>, transform_indices = @transform_2, window_bounds = array<i64: 128, 128>}, {pipeline_mode = #tpu.pipeline_mode<synchronous>, transform_indices = @transform_3, window_bounds = array<i64: 3, 128, 128>}, {pipeline_mode = #tpu.pipeline_mode<synchronous>, transform_indices = @transform_4, window_bounds = array<i64: 2, 1, 128>}, {transform_indices = @transform_5, window_bounds = array<i64: 8, 128>}]} {
    %c0 = arith.constant 0 : index
    %c0_0 = arith.constant 0 : index
    %0 = vector.load %arg1[%c0, %c0_0] : memref<8x128xf32, #tpu.memory_space<vmem>>, vector<8x128xf32>
    %c0_1 = arith.constant 0 : index
    %c0_2 = arith.constant 0 : index
    %1 = vector.load %arg3[%c0_1, %c0_2] : memref<128x128xf32, #tpu.memory_space<vmem>>, vector<128x128xf32>
    %cst = arith.constant dense<0.000000e+00> : vector<8x128xf32>
    %2 = tpu.matmul %0, %1, %cst {dimension_numbers = #tpu.dot_dimension_numbers<[1], [0], [0], [1], [0, 0, 1, 1], [], []>} : vector<8x128xf32>, vector<128x128xf32>, vector<8x128xf32> -> vector<8x128xf32>
    %c0_3 = arith.constant 0 : index
    %c0_4 = arith.constant 0 : index
    %3 = vector.load %arg2[%c0_3, %c0_4] : memref<8x128xf32, #tpu.memory_space<vmem>>, vector<8x128xf32>
    %c0_5 = arith.constant 0 : index
    %c0_6 = arith.constant 0 : index
    %c0_7 = arith.constant 0 : index
    %4 = vector.load %arg4[%c0_5, %c0_6, %c0_7] : memref<3x128x128xf32, #tpu.memory_space<vmem>>, vector<1x128x128xf32>
    %5 = vector.shape_cast %4 : vector<1x128x128xf32> to vector<128x128xf32>
    %cst_8 = arith.constant dense<0.000000e+00> : vector<8x128xf32>
    %6 = tpu.matmul %3, %5, %cst_8 {dimension_numbers = #tpu.dot_dimension_numbers<[1], [0], [0], [1], [0, 0, 1, 1], [], []>} : vector<8x128xf32>, vector<128x128xf32>, vector<8x128xf32> -> vector<8x128xf32>
    %7 = arith.addf %2, %6 : vector<8x128xf32>
    %c0_9 = arith.constant 0 : index
    %c0_10 = arith.constant 0 : index
    %c0_11 = arith.constant 0 : index
    %8 = vector.load %arg5[%c0_9, %c0_10, %c0_11] : memref<2x1x128xf32, #tpu.memory_space<vmem>>, vector<1x1x128xf32>
    %9 = vector.shape_cast %8 : vector<1x1x128xf32> to vector<1x128xf32>
    %10 = vector.broadcast %9 : vector<1x128xf32> to vector<8x128xf32>
    %11 = arith.addf %7, %10 : vector<8x128xf32>
    %cst_12 = arith.constant 0.000000e+00 : f32
    %12 = vector.broadcast %cst_12 : f32 to vector<8x128xf32>
    %13 = arith.maximumf %11, %12 : vector<8x128xf32>
    %c1 = arith.constant 1 : index
    %c0_13 = arith.constant 0 : index
    %c0_14 = arith.constant 0 : index
    %14 = vector.load %arg4[%c1, %c0_13, %c0_14] : memref<3x128x128xf32, #tpu.memory_space<vmem>>, vector<1x128x128xf32>
    %15 = vector.shape_cast %14 : vector<1x128x128xf32> to vector<128x128xf32>
    %cst_15 = arith.constant dense<0.000000e+00> : vector<8x128xf32>
    %16 = tpu.matmul %13, %15, %cst_15 {dimension_numbers = #tpu.dot_dimension_numbers<[1], [0], [0], [1], [0, 0, 1, 1], [], []>} : vector<8x128xf32>, vector<128x128xf32>, vector<8x128xf32> -> vector<8x128xf32>
    %c1_16 = arith.constant 1 : index
    %c0_17 = arith.constant 0 : index
    %c0_18 = arith.constant 0 : index
    %17 = vector.load %arg5[%c1_16, %c0_17, %c0_18] : memref<2x1x128xf32, #tpu.memory_space<vmem>>, vector<1x1x128xf32>
    %18 = vector.shape_cast %17 : vector<1x1x128xf32> to vector<1x128xf32>
    %19 = vector.broadcast %18 : vector<1x128xf32> to vector<8x128xf32>
    %20 = arith.addf %16, %19 : vector<8x128xf32>
    %cst_19 = arith.constant 0.000000e+00 : f32
    %21 = vector.broadcast %cst_19 : f32 to vector<8x128xf32>
    %22 = arith.maximumf %20, %21 : vector<8x128xf32>
    %c2 = arith.constant 2 : index
    %c0_20 = arith.constant 0 : index
    %c0_21 = arith.constant 0 : index
    %23 = vector.load %arg4[%c2, %c0_20, %c0_21] : memref<3x128x128xf32, #tpu.memory_space<vmem>>, vector<1x128x128xf32>
    %24 = vector.shape_cast %23 : vector<1x128x128xf32> to vector<128x128xf32>
    %cst_22 = arith.constant dense<0.000000e+00> : vector<8x128xf32>
    %25 = tpu.matmul %22, %24, %cst_22 {dimension_numbers = #tpu.dot_dimension_numbers<[1], [0], [0], [1], [0, 0, 1, 1], [], []>} : vector<8x128xf32>, vector<128x128xf32>, vector<8x128xf32> -> vector<8x128xf32>
    %c0_23 = arith.constant 0 : index
    %c0_24 = arith.constant 0 : index
    %26 = vector.load %arg6[%c0_23, %c0_24] : memref<8x128xf32, #tpu.memory_space<vmem>>, vector<8x128xf32>
    tpu.vector_store %arg6[%c0_23, %c0_24], %25 {strides = array<i32>} : memref<8x128xf32, #tpu.memory_space<vmem>>, vector<8x128xf32>,
    return
  }
  func.func @transform_0(%arg0: i32) -> (i32, i32) {
    %c0_i32 = arith.constant 0 : i32
    %c0_i32_0 = arith.constant 0 : i32
    return %arg0, %c0_i32 : i32, i32
  }
  func.func @transform_1(%arg0: i32) -> (i32, i32) {
    %c0_i32 = arith.constant 0 : i32
    %c0_i32_0 = arith.constant 0 : i32
    return %arg0, %c0_i32 : i32, i32
  }
  func.func @transform_2(%arg0: i32) -> (i32, i32) {
    %c0_i32 = arith.constant 0 : i32
    %c0_i32_0 = arith.constant 0 : i32
    %c0_i32_1 = arith.constant 0 : i32
    return %c0_i32, %c0_i32_0 : i32, i32
  }
  func.func @transform_3(%arg0: i32) -> (i32, i32, i32) {
    %c0_i32 = arith.constant 0 : i32
    %c0_i32_0 = arith.constant 0 : i32
    %c0_i32_1 = arith.constant 0 : i32
    %c0_i32_2 = arith.constant 0 : i32
    return %c0_i32, %c0_i32_0, %c0_i32_1 : i32, i32, i32
  }
  func.func @transform_4(%arg0: i32) -> (i32, i32, i32) {
    %c0_i32 = arith.constant 0 : i32
    %c0_i32_0 = arith.constant 0 : i32
    %c0_i32_1 = arith.constant 0 : i32
    %c0_i32_2 = arith.constant 0 : i32
    return %c0_i32, %c0_i32_0, %c0_i32_1 : i32, i32, i32
  }
  func.func @transform_5(%arg0: i32) -> (i32, i32) {
    %c0_i32 = arith.constant 0 : i32
    %c0_i32_0 = arith.constant 0 : i32
    return %arg0, %c0_i32 : i32, i32
  }
}

</mosaic_0001>

<llo_original>
// kernel: tpu_custom_call.1
$region0: #{tpu_custom_call.1}
  #allocation0 [shape = 'u32[]', space=smem, size = 0x4, offset = 0x4, fixed_abs, tag = 'smem constant byte address 0x4 - core index']
  #allocation1 [shape = 'u32[144,128]{1,0:T(1,128)}', space=vmem, size = 0x12000, scoped, tag = 'internal scratch']
  %s0 = inlined_call_operand.hbm [shape: f32[8,128], index: 0, kind: input, shape index: {}]
  %s1 = inlined_call_operand.hbm [shape: f32[8,128], index: 1, kind: input, shape index: {}]
  %s2 = inlined_call_operand.hbm [shape: f32[128,128], index: 2, kind: input, shape index: {}]
  %s3 = inlined_call_operand.hbm [shape: f32[3,128,128], index: 3, kind: input, shape index: {}]
  %s4 = inlined_call_operand.vmem [shape: f32[2,1,128], index: 4, kind: input, shape index: {}]
  %s5 = inlined_call_operand.hbm [shape: f32[8,128], index: 5, kind: output, shape index: {}]
  %s6 = sld [smem:[#allocation0]]
  $region46: #{tpu_custom_call.1} parent=0
    _
  %s8 = ssub.s32 1, %s6
  %s9 = scalar_select 0, %s8, %s6
  $region1: #{tpu_custom_call.1} parent=0
    #allocation2 [shape = 'u8[4096]{0}', space=vmem, size = 0x1000, scoped, tag = 'input window, operand 0, single buffered']
    #allocation3 [shape = 's32[1]{0}', space=sflag, size = 0x4, scoped, tag = 'scoped memory for tpu_custom_call.1']
    #allocation4 [shape = 's32[1]{0}', space=sflag, size = 0x4, scoped, tag = 'scoped memory for tpu_custom_call.1']
    #allocation5 [shape = 'u8[4096]{0}', space=vmem, size = 0x1000, scoped, tag = 'input window, operand 1, single buffered']
    #allocation6 [shape = 's32[1]{0}', space=sflag, size = 0x4, scoped, tag = 'scoped memory for tpu_custom_call.1']
    #allocation7 [shape = 'u8[65536]{0}', space=vmem, size = 0x10000, scoped, tag = 'input window, operand 2, single buffered']
    #allocation8 [shape = 'u8[196608]{0}', space=vmem, size = 0x30000, scoped, tag = 'input window, operand 3, single buffered']
    #allocation9 [shape = 's32[1]{0}', space=sflag, size = 0x4, scoped, tag = 'scoped memory for tpu_custom_call.1']
    #allocation10 [shape = 'u8[4096]{0}', space=vmem, size = 0x1000, scoped, tag = 'output window, operand 0, single buffered']
    %10 = vsyncpa [#allocation3], 0
    %11 = vsyncpa [#allocation6], 0
    %12 = vsyncpa [#allocation9], 0
    %13 = vsyncpa [#allocation4], 0
    // Predicated region
    $region2: #{tpu_custom_call.1} parent=1 // pred_check
      _
    $region3: #{tpu_custom_call.1} parent=1 // pred_check_branch
      %15 = sbr.rel (0) target = $region5
    $region4: #{tpu_custom_call.1} parent=1 // pred_region
      %s17 = ssub.s32 128, 128
      %18 = vsyncadd [#allocation3], %s17
      %s20 = sshll.u32 [#allocation2], 4
      %s21 = int_to_ptr.vmem [resolvable:$true] %s20
      %23 = dma.hbm_to_vmem [thread:$0]  %s0, 128, %s21, [#allocation3]
    $region5: #{tpu_custom_call.1} parent=1 // pred_fallthru
      _
    // Predicated region
    $region6: #{tpu_custom_call.1} parent=1 // pred_check
      _
    $region7: #{tpu_custom_call.1} parent=1 // pred_check_branch
      %25 = sbr.rel (0) target = $region9
    $region8: #{tpu_custom_call.1} parent=1 // pred_region
      %s27 = ssub.s32 128, 128
      %28 = vsyncadd [#allocation6], %s27
      %s30 = sshll.u32 [#allocation5], 4
      %s31 = int_to_ptr.vmem [resolvable:$true] %s30
      %33 = dma.hbm_to_vmem [thread:$0]  %s1, 128, %s31, [#allocation6]
    $region9: #{tpu_custom_call.1} parent=1 // pred_fallthru
      _
    // Predicated region
    $region10: #{tpu_custom_call.1} parent=1 // pred_check
      _
    $region11: #{tpu_custom_call.1} parent=1 // pred_check_branch
      %35 = sbr.rel (0) target = $region13
    $region12: #{tpu_custom_call.1} parent=1 // pred_region
      %s37 = ssub.s32 2048, 2048
      %38 = vsyncadd [#allocation6], %s37
      %s39 = sshll.u32 [#allocation7], 4
      %s40 = int_to_ptr.vmem [resolvable:$true] %s39
      %45 = dma.hbm_to_vmem [thread:$0]  %s2, 2048, %s40, [#allocation6], 128, 128, 8
    $region13: #{tpu_custom_call.1} parent=1 // pred_fallthru
      _
    // Predicated region
    $region14: #{tpu_custom_call.1} parent=1 // pred_check
      _
    $region15: #{tpu_custom_call.1} parent=1 // pred_check_branch
      %47 = sbr.rel (0) target = $region17
    $region16: #{tpu_custom_call.1} parent=1 // pred_region
      %s49 = ssub.s32 6144, 6144
      %50 = vsyncadd [#allocation9], %s49
      %s51 = sshll.u32 [#allocation8], 4
      %s52 = int_to_ptr.vmem [resolvable:$true] %s51
      %57 = dma.hbm_to_vmem [thread:$0]  %s3, 6144, %s52, [#allocation9], 128, 128, 8
    $region17: #{tpu_custom_call.1} parent=1 // pred_fallthru
      _
    // Predicated region
    $region18: #{tpu_custom_call.1} parent=1 // pred_check
      _
    $region19: #{tpu_custom_call.1} parent=1 // pred_check_branch
      %59 = sbr.rel (0) target = $region21
    $region20: #{tpu_custom_call.1} parent=1 // pred_region
      _
    $region21: #{tpu_custom_call.1} parent=1 // pred_fallthru
      _
    // Predicated region
    $region22: #{tpu_custom_call.1} parent=1 // pred_check
      _
    $region23: #{tpu_custom_call.1} parent=1 // pred_check_branch
      %61 = sbr.rel (0) target = $region25
    $region24: #{tpu_custom_call.1} parent=1 // pred_region
      %62 = dma.done [#allocation3], 128
    $region25: #{tpu_custom_call.1} parent=1 // pred_fallthru
      _
    // Predicated region
    $region26: #{tpu_custom_call.1} parent=1 // pred_check
      _
    $region27: #{tpu_custom_call.1} parent=1 // pred_check_branch
      %64 = sbr.rel (0) target = $region29
    $region28: #{tpu_custom_call.1} parent=1 // pred_region
      %65 = dma.done [#allocation6], 128
    $region29: #{tpu_custom_call.1} parent=1 // pred_fallthru
      _
    // Predicated region
    $region30: #{tpu_custom_call.1} parent=1 // pred_check
      _
    $region31: #{tpu_custom_call.1} parent=1 // pred_check_branch
      %67 = sbr.rel (0) target = $region33
    $region32: #{tpu_custom_call.1} parent=1 // pred_region
      %68 = dma.done [#allocation6], 2048
    $region33: #{tpu_custom_call.1} parent=1 // pred_fallthru
      _
    // Predicated region
    $region34: #{tpu_custom_call.1} parent=1 // pred_check
      _
    $region35: #{tpu_custom_call.1} parent=1 // pred_check_branch
      %70 = sbr.rel (0) target = $region37
    $region36: #{tpu_custom_call.1} parent=1 // pred_region
      %71 = dma.done [#allocation9], 6144
    $region37: #{tpu_custom_call.1} parent=1 // pred_fallthru
      _
    %v72 = vld [vmem:[#allocation2] sm:$0xff]
    %v73 = vld [vmem:[#allocation7] sm:$0xff]
    %v74 = vld [vmem:[#allocation7 + $0x8] sm:$0xff]
    %v75 = vld [vmem:[#allocation7 + $0x10] sm:$0xff]
    %v76 = vld [vmem:[#allocation7 + $0x18] sm:$0xff]
    %v77 = vld [vmem:[#allocation7 + $0x20] sm:$0xff]
    %v78 = vld [vmem:[#allocation7 + $0x28] sm:$0xff]
    %v79 = vld [vmem:[#allocation7 + $0x30] sm:$0xff]
    %v80 = vld [vmem:[#allocation7 + $0x38] sm:$0xff]
    %v81 = vld [vmem:[#allocation7 + $0x40] sm:$0xff]
    %v82 = vld [vmem:[#allocation7 + $0x48] sm:$0xff]
    %v83 = vld [vmem:[#allocation7 + $0x50] sm:$0xff]
    %v84 = vld [vmem:[#allocation7 + $0x58] sm:$0xff]
    %v85 = vld [vmem:[#allocation7 + $0x60] sm:$0xff]
    %v86 = vld [vmem:[#allocation7 + $0x68] sm:$0xff]
    %v87 = vld [vmem:[#allocation7 + $0x70] sm:$0xff]
    %v88 = vld [vmem:[#allocation7 + $0x78] sm:$0xff]
    %v89 = vld [vmem:[#allocation5] sm:$0xff]
    %v90 = vld [vmem:[#allocation8] sm:$0xff]
    %v91 = vld [vmem:[#allocation8 + $0x8] sm:$0xff]
    %v92 = vld [vmem:[#allocation8 + $0x10] sm:$0xff]
    %v93 = vld [vmem:[#allocation8 + $0x18] sm:$0xff]
    %v94 = vld [vmem:[#allocation8 + $0x20] sm:$0xff]
    %v95 = vld [vmem:[#allocation8 + $0x28] sm:$0xff]
    %v96 = vld [vmem:[#allocation8 + $0x30] sm:$0xff]
    %v97 = vld [vmem:[#allocation8 + $0x38] sm:$0xff]
    %v98 = vld [vmem:[#allocation8 + $0x40] sm:$0xff]
    %v99 = vld [vmem:[#allocation8 + $0x48] sm:$0xff]
    %v100 = vld [vmem:[#allocation8 + $0x50] sm:$0xff]
    %v101 = vld [vmem:[#allocation8 + $0x58] sm:$0xff]
    %v102 = vld [vmem:[#allocation8 + $0x60] sm:$0xff]
    %v103 = vld [vmem:[#allocation8 + $0x68] sm:$0xff]
    %v104 = vld [vmem:[#allocation8 + $0x70] sm:$0xff]
    %v105 = vld [vmem:[#allocation8 + $0x78] sm:$0xff]
    %106 = vmatprep.subr.mxu0 0.0
    %107 = vmatpush1.msra.mxu0 %v90
    %108 = vmatprep.subr.mxu0 0.0
    %109 = vmatpush1.msra.mxu0 %v91
    %110 = vmatprep.subr.mxu0 0.0
    %111 = vmatpush1.msra.mxu0 %v92
    %112 = vmatprep.subr.mxu0 0.0
    %113 = vmatpush1.msra.mxu0 %v93
    %114 = vmatprep.subr.mxu0 0.0
    %115 = vmatpush1.msra.mxu0 %v94
    %116 = vmatprep.subr.mxu0 0.0
    %117 = vmatpush1.msra.mxu0 %v95
    %118 = vmatprep.subr.mxu0 0.0
    %119 = vmatpush1.msra.mxu0 %v96
    %120 = vmatprep.subr.mxu0 0.0
    %121 = vmatpush1.msra.mxu0 %v97
    %122 = vmatprep.subr.mxu0 0.0
    %123 = vmatpush1.msra.mxu0 %v98
    %124 = vmatprep.subr.mxu0 0.0
    %125 = vmatpush1.msra.mxu0 %v99
    %126 = vmatprep.subr.mxu0 0.0
    %127 = vmatpush1.msra.mxu0 %v100
    %128 = vmatprep.subr.mxu0 0.0
    %129 = vmatpush1.msra.mxu0 %v101
    %130 = vmatprep.subr.mxu0 0.0
    %131 = vmatpush1.msra.mxu0 %v102
    %132 = vmatprep.subr.mxu0 0.0
    %133 = vmatpush1.msra.mxu0 %v103
    %134 = vmatprep.subr.mxu0 0.0
    %135 = vmatpush1.msra.mxu0 %v104
    %136 = vmatprep.subr.mxu0 0.0
    %137 = vmatpush1.msra.mxu0 %v105
    %138 = vmatprep.subr.mxu0 0.0
    %139 = vmatpush1.msra.mxu0 0.0
    %140 = vmatprep.subr.mxu0 0.0
    %141 = vmatpush1.msra.mxu0 0.0
    %142 = vmatprep.subr.mxu0 0.0
    %143 = vmatpush1.msra.mxu0 0.0
    %144 = vmatprep.subr.mxu0 0.0
    %145 = vmatpush1.msra.mxu0 0.0
    %146 = vmatprep.subr.mxu0 0.0
    %147 = vmatpush1.msra.mxu0 0.0
    %148 = vmatprep.subr.mxu0 0.0
    %149 = vmatpush1.msra.mxu0 0.0
    %150 = vmatprep.subr.mxu0 0.0
    %151 = vmatpush1.msra.mxu0 0.0
    %152 = vmatprep.subr.mxu0 0.0
    %153 = vmatpush1.msra.mxu0 0.0
    %154 = vmatprep.subr.mxu0 0.0
    %155 = vmatpush1.msra.mxu0 0.0
    %156 = vmatprep.subr.mxu0 0.0
    %157 = vmatpush1.msra.mxu0 0.0
    %158 = vmatprep.subr.mxu0 0.0
    %159 = vmatpush1.msra.mxu0 0.0
    %160 = vmatprep.subr.mxu0 0.0
    %161 = vmatpush1.msra.mxu0 0.0
    %162 = vmatprep.subr.mxu0 0.0
    %163 = vmatpush1.msra.mxu0 0.0
    %164 = vmatprep.subr.mxu0 0.0
    %165 = vmatpush1.msra.mxu0 0.0
    %166 = vmatprep.subr.mxu0 0.0
    %167 = vmatpush1.msra.mxu0 0.0
    %168 = vmatprep.subr.mxu0 0.0
    %169 = vmatpush1.msra.mxu0 0.0
    %170 = vmatprep.mubr.f32.mxu0 0.0
    %171 = vmatmul.mubr.f32.gmra.mrb[0].mxu0 %v89
    %v172 = vpop.f32.mrb[0].mxu0
    %v173 = vadd.f32 0.0, %v172
    %v174 = vpop.f32.mrb[0].mxu0
    %175 = vdwg.mxu0
    %176 = vmatprep.subr.mxu0 0.0
    %177 = vmatpush1.msra.mxu0 %v73
    %178 = vmatprep.subr.mxu0 0.0
    %179 = vmatpush1.msra.mxu0 %v74
    %180 = vmatprep.subr.mxu0 0.0
    %181 = vmatpush1.msra.mxu0 %v75
    %182 = vmatprep.subr.mxu0 0.0
    %183 = vmatpush1.msra.mxu0 %v76
    %184 = vmatprep.subr.mxu0 0.0
    %185 = vmatpush1.msra.mxu0 %v77
    %186 = vmatprep.subr.mxu0 0.0
    %187 = vmatpush1.msra.mxu0 %v78
    %188 = vmatprep.subr.mxu0 0.0
    %189 = vmatpush1.msra.mxu0 %v79
    %190 = vmatprep.subr.mxu0 0.0
    %191 = vmatpush1.msra.mxu0 %v80
    %192 = vmatprep.subr.mxu0 0.0
    %193 = vmatpush1.msra.mxu0 %v81
    %194 = vmatprep.subr.mxu0 0.0
    %195 = vmatpush1.msra.mxu0 %v82
    %196 = vmatprep.subr.mxu0 0.0
    %197 = vmatpush1.msra.mxu0 %v83
    %198 = vmatprep.subr.mxu0 0.0
    %199 = vmatpush1.msra.mxu0 %v84
    %200 = vmatprep.subr.mxu0 0.0
    %201 = vmatpush1.msra.mxu0 %v85
    %202 = vmatprep.subr.mxu0 0.0
    %203 = vmatpush1.msra.mxu0 %v86
    %204 = vmatprep.subr.mxu0 0.0
    %205 = vmatpush1.msra.mxu0 %v87
    %206 = vmatprep.subr.mxu0 0.0
    %207 = vmatpush1.msra.mxu0 %v88
    %208 = vmatprep.subr.mxu0 0.0
    %209 = vmatpush1.msra.mxu0 0.0
    %210 = vmatprep.subr.mxu0 0.0
    %211 = vmatpush1.msra.mxu0 0.0
    %212 = vmatprep.subr.mxu0 0.0
    %213 = vmatpush1.msra.mxu0 0.0
    %214 = vmatprep.subr.mxu0 0.0
    %215 = vmatpush1.msra.mxu0 0.0
    %216 = vmatprep.subr.mxu0 0.0
    %217 = vmatpush1.msra.mxu0 0.0
    %218 = vmatprep.subr.mxu0 0.0
    %219 = vmatpush1.msra.mxu0 0.0
    %220 = vmatprep.subr.mxu0 0.0
    %221 = vmatpush1.msra.mxu0 0.0
    %222 = vmatprep.subr.mxu0 0.0
    %223 = vmatpush1.msra.mxu0 0.0
    %224 = vmatprep.subr.mxu0 0.0
    %225 = vmatpush1.msra.mxu0 0.0
    %226 = vmatprep.subr.mxu0 0.0
    %227 = vmatpush1.msra.mxu0 0.0
    %228 = vmatprep.subr.mxu0 0.0
    %229 = vmatpush1.msra.mxu0 0.0
    %230 = vmatprep.subr.mxu0 0.0
    %231 = vmatpush1.msra.mxu0 0.0
    %232 = vmatprep.subr.mxu0 0.0
    %233 = vmatpush1.msra.mxu0 0.0
    %234 = vmatprep.subr.mxu0 0.0
    %235 = vmatpush1.msra.mxu0 0.0
    %236 = vmatprep.subr.mxu0 0.0
    %237 = vmatpush1.msra.mxu0 0.0
    %238 = vmatprep.subr.mxu0 0.0
    %239 = vmatpush1.msra.mxu0 0.0
    %240 = vmatprep.mubr.f32.mxu0 0.0
    %241 = vmatmul.mubr.f32.gmra.mrb[0].mxu0 %v72
    %v242 = vpop.f32.mrb[0].mxu0
    %v243 = vadd.f32 %v173, %v242
    %v244 = vpop.f32.mrb[0].mxu0
    %245 = vdwg.mxu0
    %v246 = vld [vmem:[%s4] sm:$0x1]
    %v248 = vlaneseq
    %v249 = vshrl.u32 %v248, 7
    %v250 = vsub.s32 0, %v249
    %v251 = vrot.slane %v246, %v250
    %v253 = vadd.f32 %v243, %v251
    %v254 = vmax.f32 %v253, 0.0
    %s255 = scalar_lea.vmem [#allocation8], 128
    %v256 = vld [vmem:[%s255] sm:$0xff]
    %v257 = vld [vmem:[%s255 + $0x8] sm:$0xff]
    %v258 = vld [vmem:[%s255 + $0x10] sm:$0xff]
    %v259 = vld [vmem:[%s255 + $0x18] sm:$0xff]
    %v260 = vld [vmem:[%s255 + $0x20] sm:$0xff]
    %v261 = vld [vmem:[%s255 + $0x28] sm:$0xff]
    %v262 = vld [vmem:[%s255 + $0x30] sm:$0xff]
    %v263 = vld [vmem:[%s255 + $0x38] sm:$0xff]
    %v264 = vld [vmem:[%s255 + $0x40] sm:$0xff]
    %v265 = vld [vmem:[%s255 + $0x48] sm:$0xff]
    %v266 = vld [vmem:[%s255 + $0x50] sm:$0xff]
    %v267 = vld [vmem:[%s255 + $0x58] sm:$0xff]
    %v268 = vld [vmem:[%s255 + $0x60] sm:$0xff]
    %v269 = vld [vmem:[%s255 + $0x68] sm:$0xff]
    %v270 = vld [vmem:[%s255 + $0x70] sm:$0xff]
    %v271 = vld [vmem:[%s255 + $0x78] sm:$0xff]
    %s272 = scalar_lea.vmem %s4, 1
    %v273 = vld [vmem:[%s272] sm:$0x1]
    %v275 = vlaneseq
    %v276 = vshrl.u32 %v275, 7
    %v277 = vsub.s32 0, %v276
    %v278 = vrot.slane %v273, %v277
    %280 = vmatprep.subr.mxu0 0.0
    %281 = vmatpush1.msra.mxu0 %v256
    %282 = vmatprep.subr.mxu0 0.0
    %283 = vmatpush1.msra.mxu0 %v257
    %284 = vmatprep.subr.mxu0 0.0
    %285 = vmatpush1.msra.mxu0 %v258
    %286 = vmatprep.subr.mxu0 0.0
    %287 = vmatpush1.msra.mxu0 %v259
    %288 = vmatprep.subr.mxu0 0.0
    %289 = vmatpush1.msra.mxu0 %v260
    %290 = vmatprep.subr.mxu0 0.0
    %291 = vmatpush1.msra.mxu0 %v261
    %292 = vmatprep.subr.mxu0 0.0
    %293 = vmatpush1.msra.mxu0 %v262
    %294 = vmatprep.subr.mxu0 0.0
    %295 = vmatpush1.msra.mxu0 %v263
    %296 = vmatprep.subr.mxu0 0.0
    %297 = vmatpush1.msra.mxu0 %v264
    %298 = vmatprep.subr.mxu0 0.0
    %299 = vmatpush1.msra.mxu0 %v265
    %300 = vmatprep.subr.mxu0 0.0
    %301 = vmatpush1.msra.mxu0 %v266
    %302 = vmatprep.subr.mxu0 0.0
    %303 = vmatpush1.msra.mxu0 %v267
    %304 = vmatprep.subr.mxu0 0.0
    %305 = vmatpush1.msra.mxu0 %v268
    %306 = vmatprep.subr.mxu0 0.0
    %307 = vmatpush1.msra.mxu0 %v269
    %308 = vmatprep.subr.mxu0 0.0
    %309 = vmatpush1.msra.mxu0 %v270
    %310 = vmatprep.subr.mxu0 0.0
    %311 = vmatpush1.msra.mxu0 %v271
    %312 = vmatprep.subr.mxu0 0.0
    %313 = vmatpush1.msra.mxu0 0.0
    %314 = vmatprep.subr.mxu0 0.0
    %315 = vmatpush1.msra.mxu0 0.0
    %316 = vmatprep.subr.mxu0 0.0
    %317 = vmatpush1.msra.mxu0 0.0
    %318 = vmatprep.subr.mxu0 0.0
    %319 = vmatpush1.msra.mxu0 0.0
    %320 = vmatprep.subr.mxu0 0.0
    %321 = vmatpush1.msra.mxu0 0.0
    %322 = vmatprep.subr.mxu0 0.0
    %323 = vmatpush1.msra.mxu0 0.0
    %324 = vmatprep.subr.mxu0 0.0
    %325 = vmatpush1.msra.mxu0 0.0
    %326 = vmatprep.subr.mxu0 0.0
    %327 = vmatpush1.msra.mxu0 0.0
    %328 = vmatprep.subr.mxu0 0.0
    %329 = vmatpush1.msra.mxu0 0.0
    %330 = vmatprep.subr.mxu0 0.0
    %331 = vmatpush1.msra.mxu0 0.0
    %332 = vmatprep.subr.mxu0 0.0
    %333 = vmatpush1.msra.mxu0 0.0
    %334 = vmatprep.subr.mxu0 0.0
    %335 = vmatpush1.msra.mxu0 0.0
    %336 = vmatprep.subr.mxu0 0.0
    %337 = vmatpush1.msra.mxu0 0.0
    %338 = vmatprep.subr.mxu0 0.0
    %339 = vmatpush1.msra.mxu0 0.0
    %340 = vmatprep.subr.mxu0 0.0
    %341 = vmatpush1.msra.mxu0 0.0
    %342 = vmatprep.subr.mxu0 0.0
    %343 = vmatpush1.msra.mxu0 0.0
    %344 = vmatprep.mubr.f32.mxu0 0.0
    %345 = vmatmul.mubr.f32.gmra.mrb[0].mxu0 %v254
    %v346 = vpop.f32.mrb[0].mxu0
    %v347 = vadd.f32 %v278, %v346
    %v348 = vpop.f32.mrb[0].mxu0
    %349 = vdwg.mxu0
    %v350 = vmax.f32 %v347, 0.0
    %s351 = scalar_lea.vmem [#allocation8], 256
    %v352 = vld [vmem:[%s351] sm:$0xff]
    %v353 = vld [vmem:[%s351 + $0x8] sm:$0xff]
    %v354 = vld [vmem:[%s351 + $0x10] sm:$0xff]
    %v355 = vld [vmem:[%s351 + $0x18] sm:$0xff]
    %v356 = vld [vmem:[%s351 + $0x20] sm:$0xff]
    %v357 = vld [vmem:[%s351 + $0x28] sm:$0xff]
    %v358 = vld [vmem:[%s351 + $0x30] sm:$0xff]
    %v359 = vld [vmem:[%s351 + $0x38] sm:$0xff]
    %v360 = vld [vmem:[%s351 + $0x40] sm:$0xff]
    %v361 = vld [vmem:[%s351 + $0x48] sm:$0xff]
    %v362 = vld [vmem:[%s351 + $0x50] sm:$0xff]
    %v363 = vld [vmem:[%s351 + $0x58] sm:$0xff]
    %v364 = vld [vmem:[%s351 + $0x60] sm:$0xff]
    %v365 = vld [vmem:[%s351 + $0x68] sm:$0xff]
    %v366 = vld [vmem:[%s351 + $0x70] sm:$0xff]
    %v367 = vld [vmem:[%s351 + $0x78] sm:$0xff]
    %368 = vmatprep.subr.mxu0 0.0
    %369 = vmatpush1.msra.mxu0 %v352
    %370 = vmatprep.subr.mxu0 0.0
    %371 = vmatpush1.msra.mxu0 %v353
    %372 = vmatprep.subr.mxu0 0.0
    %373 = vmatpush1.msra.mxu0 %v354
    %374 = vmatprep.subr.mxu0 0.0
    %375 = vmatpush1.msra.mxu0 %v355
    %376 = vmatprep.subr.mxu0 0.0
    %377 = vmatpush1.msra.mxu0 %v356
    %378 = vmatprep.subr.mxu0 0.0
    %379 = vmatpush1.msra.mxu0 %v357
    %380 = vmatprep.subr.mxu0 0.0
    %381 = vmatpush1.msra.mxu0 %v358
    %382 = vmatprep.subr.mxu0 0.0
    %383 = vmatpush1.msra.mxu0 %v359
    %384 = vmatprep.subr.mxu0 0.0
    %385 = vmatpush1.msra.mxu0 %v360
    %386 = vmatprep.subr.mxu0 0.0
    %387 = vmatpush1.msra.mxu0 %v361
    %388 = vmatprep.subr.mxu0 0.0
    %389 = vmatpush1.msra.mxu0 %v362
    %390 = vmatprep.subr.mxu0 0.0
    %391 = vmatpush1.msra.mxu0 %v363
    %392 = vmatprep.subr.mxu0 0.0
    %393 = vmatpush1.msra.mxu0 %v364
    %394 = vmatprep.subr.mxu0 0.0
    %395 = vmatpush1.msra.mxu0 %v365
    %396 = vmatprep.subr.mxu0 0.0
    %397 = vmatpush1.msra.mxu0 %v366
    %398 = vmatprep.subr.mxu0 0.0
    %399 = vmatpush1.msra.mxu0 %v367
    %400 = vmatprep.subr.mxu0 0.0
    %401 = vmatpush1.msra.mxu0 0.0
    %402 = vmatprep.subr.mxu0 0.0
    %403 = vmatpush1.msra.mxu0 0.0
    %404 = vmatprep.subr.mxu0 0.0
    %405 = vmatpush1.msra.mxu0 0.0
    %406 = vmatprep.subr.mxu0 0.0
    %407 = vmatpush1.msra.mxu0 0.0
    %408 = vmatprep.subr.mxu0 0.0
    %409 = vmatpush1.msra.mxu0 0.0
    %410 = vmatprep.subr.mxu0 0.0
    %411 = vmatpush1.msra.mxu0 0.0
    %412 = vmatprep.subr.mxu0 0.0
    %413 = vmatpush1.msra.mxu0 0.0
    %414 = vmatprep.subr.mxu0 0.0
    %415 = vmatpush1.msra.mxu0 0.0
    %416 = vmatprep.subr.mxu0 0.0
    %417 = vmatpush1.msra.mxu0 0.0
    %418 = vmatprep.subr.mxu0 0.0
    %419 = vmatpush1.msra.mxu0 0.0
    %420 = vmatprep.subr.mxu0 0.0
    %421 = vmatpush1.msra.mxu0 0.0
    %422 = vmatprep.subr.mxu0 0.0
    %423 = vmatpush1.msra.mxu0 0.0
    %424 = vmatprep.subr.mxu0 0.0
    %425 = vmatpush1.msra.mxu0 0.0
    %426 = vmatprep.subr.mxu0 0.0
    %427 = vmatpush1.msra.mxu0 0.0
    %428 = vmatprep.subr.mxu0 0.0
    %429 = vmatpush1.msra.mxu0 0.0
    %430 = vmatprep.subr.mxu0 0.0
    %431 = vmatpush1.msra.mxu0 0.0
    %432 = vmatprep.mubr.f32.mxu0 0.0
    %433 = vmatmul.mubr.f32.gmra.mrb[0].mxu0 %v350
    %v434 = vpop.f32.mrb[0].mxu0
    %v435 = vadd.f32 0.0, %v434
    %v436 = vpop.f32.mrb[0].mxu0
    %437 = vdwg.mxu0
    %438 = vst [vmem:[#allocation10] sm:$0xff] %v435
    // Predicated region
    $region38: #{tpu_custom_call.1} parent=1 // pred_check
      _
    $region39: #{tpu_custom_call.1} parent=1 // pred_check_branch
      %440 = sbr.rel (0) target = $region41
    $region40: #{tpu_custom_call.1} parent=1 // pred_region
      %s442 = ssub.s32 128, 128
      %443 = vsyncadd [#allocation4], %s442
      %s445 = sshll.u32 [#allocation10], 4
      %s446 = int_to_ptr.vmem [resolvable:$true] %s445
      %448 = dma.vmem_to_hbm [thread:$0]  %s446, 128, %s5, [#allocation4]
    $region41: #{tpu_custom_call.1} parent=1 // pred_fallthru
      _
    // Predicated region
    $region42: #{tpu_custom_call.1} parent=1 // pred_check
      _
    $region43: #{tpu_custom_call.1} parent=1 // pred_check_branch
      %450 = sbr.rel (0) target = $region45
    $region44: #{tpu_custom_call.1} parent=1 // pred_region
      %451 = dma.done [#allocation4], 128
    $region45: #{tpu_custom_call.1} parent=1 // pred_fallthru
      _
    %452 = vsyncpa [#allocation3], 1
    %453 = vsyncpa [#allocation6], 1
    %454 = vsyncpa [#allocation9], 1
    %455 = vsyncpa [#allocation4], 1

// kernel: tpu_custom_call.1
$region0: #{tpu_custom_call.1}
  #allocation0 [shape = 'u32[]', space=smem, size = 0x4, offset = 0x4, fixed_abs, tag = 'smem constant byte address 0x4 - core index']
  #allocation1 [shape = 'u32[144,128]{1,0:T(1,128)}', space=vmem, size = 0x12000, scoped, tag = 'internal scratch']
  %s0 = inlined_call_operand.hbm [shape: f32[8,128], index: 0, kind: input, shape index: {}]
  %s1 = inlined_call_operand.hbm [shape: f32[8,128], index: 1, kind: input, shape index: {}]
  %s2 = inlined_call_operand.hbm [shape: f32[128,128], index: 2, kind: input, shape index: {}]
  %s3 = inlined_call_operand.hbm [shape: f32[3,128,128], index: 3, kind: input, shape index: {}]
  %s4 = inlined_call_operand.vmem [shape: f32[2,1,128], index: 4, kind: input, shape index: {}]
  %s5 = inlined_call_operand.hbm [shape: f32[8,128], index: 5, kind: output, shape index: {}]
  %s6 = sld [smem:[#allocation0]]
  $region46: #{tpu_custom_call.1} parent=0
    _
  %s8 = ssub.s32 1, %s6
  %s9 = scalar_select 0, %s8, %s6
  $region1: #{tpu_custom_call.1} parent=0
    #allocation2 [shape = 'u8[4096]{0}', space=vmem, size = 0x1000, scoped, tag = 'input window, operand 0, single buffered']
    #allocation3 [shape = 's32[1]{0}', space=sflag, size = 0x4, scoped, tag = 'scoped memory for tpu_custom_call.1']
    #allocation4 [shape = 's32[1]{0}', space=sflag, size = 0x4, scoped, tag = 'scoped memory for tpu_custom_call.1']
    #allocation5 [shape = 'u8[4096]{0}', space=vmem, size = 0x1000, scoped, tag = 'input window, operand 1, single buffered']
    #allocation6 [shape = 's32[1]{0}', space=sflag, size = 0x4, scoped, tag = 'scoped memory for tpu_custom_call.1']
    #allocation7 [shape = 'u8[65536]{0}', space=vmem, size = 0x10000, scoped, tag = 'input window, operand 2, single buffered']
    #allocation8 [shape = 'u8[196608]{0}', space=vmem, size = 0x30000, scoped, tag = 'input window, operand 3, single buffered']
    #allocation9 [shape = 's32[1]{0}', space=sflag, size = 0x4, scoped, tag = 'scoped memory for tpu_custom_call.1']
    #allocation10 [shape = 'u8[4096]{0}', space=vmem, size = 0x1000, scoped, tag = 'output window, operand 0, single buffered']
    %10 = vsyncpa [#allocation3], 0
    %11 = vsyncpa [#allocation6], 0
    %12 = vsyncpa [#allocation9], 0
    %13 = vsyncpa [#allocation4], 0
    // Predicated region
    $region2: #{tpu_custom_call.1} parent=1 // pred_check
      _
    $region3: #{tpu_custom_call.1} parent=1 // pred_check_branch
      %15 = sbr.rel (0) target = $region5
    $region4: #{tpu_custom_call.1} parent=1 // pred_region
      %s17 = ssub.s32 128, 128
      %18 = vsyncadd [#allocation3], %s17
      %s20 = sshll.u32 [#allocation2], 4
      %s21 = int_to_ptr.vmem [resolvable:$true] %s20
      %23 = dma.hbm_to_vmem [thread:$0]  %s0, 128, %s21, [#allocation3]
    $region5: #{tpu_custom_call.1} parent=1 // pred_fallthru
      _
    // Predicated region
    $region6: #{tpu_custom_call.1} parent=1 // pred_check
      _
    $region7: #{tpu_custom_call.1} parent=1 // pred_check_branch
      %25 = sbr.rel (0) target = $region9
    $region8: #{tpu_custom_call.1} parent=1 // pred_region
      %s27 = ssub.s32 128, 128
      %28 = vsyncadd [#allocation6], %s27
      %s30 = sshll.u32 [#allocation5], 4
      %s31 = int_to_ptr.vmem [resolvable:$true] %s30
      %33 = dma.hbm_to_vmem [thread:$0]  %s1, 128, %s31, [#allocation6]
    $region9: #{tpu_custom_call.1} parent=1 // pred_fallthru
      _
    // Predicated region
    $region10: #{tpu_custom_call.1} parent=1 // pred_check
      _
    $region11: #{tpu_custom_call.1} parent=1 // pred_check_branch
      %35 = sbr.rel (0) target = $region13
    $region12: #{tpu_custom_call.1} parent=1 // pred_region
      %s37 = ssub.s32 2048, 2048
      %38 = vsyncadd [#allocation6], %s37
      %s39 = sshll.u32 [#allocation7], 4
      %s40 = int_to_ptr.vmem [resolvable:$true] %s39
      %45 = dma.hbm_to_vmem [thread:$0]  %s2, 2048, %s40, [#allocation6], 128, 128, 8
    $region13: #{tpu_custom_call.1} parent=1 // pred_fallthru
      _
    // Predicated region
    $region14: #{tpu_custom_call.1} parent=1 // pred_check
      _
    $region15: #{tpu_custom_call.1} parent=1 // pred_check_branch
      %47 = sbr.rel (0) target = $region17
    $region16: #{tpu_custom_call.1} parent=1 // pred_region
      %s49 = ssub.s32 6144, 6144
      %50 = vsyncadd [#allocation9], %s49
      %s51 = sshll.u32 [#allocation8], 4
      %s52 = int_to_ptr.vmem [resolvable:$true] %s51
      %57 = dma.hbm_to_vmem [thread:$0]  %s3, 6144, %s52, [#allocation9], 128, 128, 8
    $region17: #{tpu_custom_call.1} parent=1 // pred_fallthru
      _
    // Predicated region
    $region18: #{tpu_custom_call.1} parent=1 // pred_check
      _
    $region19: #{tpu_custom_call.1} parent=1 // pred_check_branch
      %59 = sbr.rel (0) target = $region21
    $region20: #{tpu_custom_call.1} parent=1 // pred_region
      _
    $region21: #{tpu_custom_call.1} parent=1 // pred_fallthru
      _
    // Predicated region
    $region22: #{tpu_custom_call.1} parent=1 // pred_check
      _
    $region23: #{tpu_custom_call.1} parent=1 // pred_check_branch
      %61 = sbr.rel (0) target = $region25
    $region24: #{tpu_custom_call.1} parent=1 // pred_region
      %62 = dma.done [#allocation3], 128
    $region25: #{tpu_custom_call.1} parent=1 // pred_fallthru
      _
    // Predicated region
    $region26: #{tpu_custom_call.1} parent=1 // pred_check
      _
    $region27: #{tpu_custom_call.1} parent=1 // pred_check_branch
      %64 = sbr.rel (0) target = $region29
    $region28: #{tpu_custom_call.1} parent=1 // pred_region
      %65 = dma.done [#allocation6], 128
    $region29: #{tpu_custom_call.1} parent=1 // pred_fallthru
      _
    // Predicated region
    $region30: #{tpu_custom_call.1} parent=1 // pred_check
      _
    $region31: #{tpu_custom_call.1} parent=1 // pred_check_branch
      %67 = sbr.rel (0) target = $region33
    $region32: #{tpu_custom_call.1} parent=1 // pred_region
      %68 = dma.done [#allocation6], 2048
    $region33: #{tpu_custom_call.1} parent=1 // pred_fallthru
      _
    // Predicated region
    $region34: #{tpu_custom_call.1} parent=1 // pred_check
      _
    $region35: #{tpu_custom_call.1} parent=1 // pred_check_branch
      %70 = sbr.rel (0) target = $region37
    $region36: #{tpu_custom_call.1} parent=1 // pred_region
      %71 = dma.done [#allocation9], 6144
    $region37: #{tpu_custom_call.1} parent=1 // pred_fallthru
      _
    %v72 = vld [vmem:[#allocation2] sm:$0xff]
    %v73 = vld [vmem:[#allocation7] sm:$0xff]
    %v74 = vld [vmem:[#allocation7 + $0x8] sm:$0xff]
    %v75 = vld [vmem:[#allocation7 + $0x10] sm:$0xff]
    %v76 = vld [vmem:[#allocation7 + $0x18] sm:$0xff]
    %v77 = vld [vmem:[#allocation7 + $0x20] sm:$0xff]
    %v78 = vld [vmem:[#allocation7 + $0x28] sm:$0xff]
    %v79 = vld [vmem:[#allocation7 + $0x30] sm:$0xff]
    %v80 = vld [vmem:[#allocation7 + $0x38] sm:$0xff]
    %v81 = vld [vmem:[#allocation7 + $0x40] sm:$0xff]
    %v82 = vld [vmem:[#allocation7 + $0x48] sm:$0xff]
    %v83 = vld [vmem:[#allocation7 + $0x50] sm:$0xff]
    %v84 = vld [vmem:[#allocation7 + $0x58] sm:$0xff]
    %v85 = vld [vmem:[#allocation7 + $0x60] sm:$0xff]
    %v86 = vld [vmem:[#allocation7 + $0x68] sm:$0xff]
    %v87 = vld [vmem:[#allocation7 + $0x70] sm:$0xff]
    %v88 = vld [vmem:[#allocation7 + $0x78] sm:$0xff]
    %v89 = vld [vmem:[#allocation5] sm:$0xff]
    %v90 = vld [vmem:[#allocation8] sm:$0xff]
    %v91 = vld [vmem:[#allocation8 + $0x8] sm:$0xff]
    %v92 = vld [vmem:[#allocation8 + $0x10] sm:$0xff]
    %v93 = vld [vmem:[#allocation8 + $0x18] sm:$0xff]
    %v94 = vld [vmem:[#allocation8 + $0x20] sm:$0xff]
    %v95 = vld [vmem:[#allocation8 + $0x28] sm:$0xff]
    %v96 = vld [vmem:[#allocation8 + $0x30] sm:$0xff]
    %v97 = vld [vmem:[#allocation8 + $0x38] sm:$0xff]
    %v98 = vld [vmem:[#allocation8 + $0x40] sm:$0xff]
    %v99 = vld [vmem:[#allocation8 + $0x48] sm:$0xff]
    %v100 = vld [vmem:[#allocation8 + $0x50] sm:$0xff]
    %v101 = vld [vmem:[#allocation8 + $0x58] sm:$0xff]
    %v102 = vld [vmem:[#allocation8 + $0x60] sm:$0xff]
    %v103 = vld [vmem:[#allocation8 + $0x68] sm:$0xff]
    %v104 = vld [vmem:[#allocation8 + $0x70] sm:$0xff]
    %v105 = vld [vmem:[#allocation8 + $0x78] sm:$0xff]
    %106 = vmatprep.subr.mxu0 0.0
    %107 = vmatpush1.msra.mxu0 %v90
    %108 = vmatprep.subr.mxu0 0.0
    %109 = vmatpush1.msra.mxu0 %v91
    %110 = vmatprep.subr.mxu0 0.0
    %111 = vmatpush1.msra.mxu0 %v92
    %112 = vmatprep.subr.mxu0 0.0
    %113 = vmatpush1.msra.mxu0 %v93
    %114 = vmatprep.subr.mxu0 0.0
    %115 = vmatpush1.msra.mxu0 %v94
    %116 = vmatprep.subr.mxu0 0.0
    %117 = vmatpush1.msra.mxu0 %v95
    %118 = vmatprep.subr.mxu0 0.0
    %119 = vmatpush1.msra.mxu0 %v96
    %120 = vmatprep.subr.mxu0 0.0
    %121 = vmatpush1.msra.mxu0 %v97
    %122 = vmatprep.subr.mxu0 0.0
    %123 = vmatpush1.msra.mxu0 %v98
    %124 = vmatprep.subr.mxu0 0.0
    %125 = vmatpush1.msra.mxu0 %v99
    %126 = vmatprep.subr.mxu0 0.0
    %127 = vmatpush1.msra.mxu0 %v100
    %128 = vmatprep.subr.mxu0 0.0
    %129 = vmatpush1.msra.mxu0 %v101
    %130 = vmatprep.subr.mxu0 0.0
    %131 = vmatpush1.msra.mxu0 %v102
    %132 = vmatprep.subr.mxu0 0.0
    %133 = vmatpush1.msra.mxu0 %v103
    %134 = vmatprep.subr.mxu0 0.0
    %135 = vmatpush1.msra.mxu0 %v104
    %136 = vmatprep.subr.mxu0 0.0
    %137 = vmatpush1.msra.mxu0 %v105
    %138 = vmatprep.subr.mxu0 0.0
    %139 = vmatpush1.msra.mxu0 0.0
    %140 = vmatprep.subr.mxu0 0.0
    %141 = vmatpush1.msra.mxu0 0.0
    %142 = vmatprep.subr.mxu0 0.0
    %143 = vmatpush1.msra.mxu0 0.0
    %144 = vmatprep.subr.mxu0 0.0
    %145 = vmatpush1.msra.mxu0 0.0
    %146 = vmatprep.subr.mxu0 0.0
    %147 = vmatpush1.msra.mxu0 0.0
    %148 = vmatprep.subr.mxu0 0.0
    %149 = vmatpush1.msra.mxu0 0.0
    %150 = vmatprep.subr.mxu0 0.0
    %151 = vmatpush1.msra.mxu0 0.0
    %152 = vmatprep.subr.mxu0 0.0
    %153 = vmatpush1.msra.mxu0 0.0
    %154 = vmatprep.subr.mxu0 0.0
    %155 = vmatpush1.msra.mxu0 0.0
    %156 = vmatprep.subr.mxu0 0.0
    %157 = vmatpush1.msra.mxu0 0.0
    %158 = vmatprep.subr.mxu0 0.0
    %159 = vmatpush1.msra.mxu0 0.0
    %160 = vmatprep.subr.mxu0 0.0
    %161 = vmatpush1.msra.mxu0 0.0
    %162 = vmatprep.subr.mxu0 0.0
    %163 = vmatpush1.msra.mxu0 0.0
    %164 = vmatprep.subr.mxu0 0.0
    %165 = vmatpush1.msra.mxu0 0.0
    %166 = vmatprep.subr.mxu0 0.0
    %167 = vmatpush1.msra.mxu0 0.0
    %168 = vmatprep.subr.mxu0 0.0
    %169 = vmatpush1.msra.mxu0 0.0
    %170 = vmatprep.mubr.f32.mxu0 0.0
    %171 = vmatmul.mubr.f32.gmra.mrb[0].mxu0 %v89
    %v172 = vpop.f32.mrb[0].mxu0
    %v173 = vadd.f32 0.0, %v172
    %v174 = vpop.f32.mrb[0].mxu0
    %175 = vdwg.mxu0
    %176 = vmatprep.subr.mxu0 0.0
    %177 = vmatpush1.msra.mxu0 %v73
    %178 = vmatprep.subr.mxu0 0.0
    %179 = vmatpush1.msra.mxu0 %v74
    %180 = vmatprep.subr.mxu0 0.0
    %181 = vmatpush1.msra.mxu0 %v75
    %182 = vmatprep.subr.mxu0 0.0
    %183 = vmatpush1.msra.mxu0 %v76
    %184 = vmatprep.subr.mxu0 0.0
    %185 = vmatpush1.msra.mxu0 %v77
    %186 = vmatprep.subr.mxu0 0.0
    %187 = vmatpush1.msra.mxu0 %v78
    %188 = vmatprep.subr.mxu0 0.0
    %189 = vmatpush1.msra.mxu0 %v79
    %190 = vmatprep.subr.mxu0 0.0
    %191 = vmatpush1.msra.mxu0 %v80
    %192 = vmatprep.subr.mxu0 0.0
    %193 = vmatpush1.msra.mxu0 %v81
    %194 = vmatprep.subr.mxu0 0.0
    %195 = vmatpush1.msra.mxu0 %v82
    %196 = vmatprep.subr.mxu0 0.0
    %197 = vmatpush1.msra.mxu0 %v83
    %198 = vmatprep.subr.mxu0 0.0
    %199 = vmatpush1.msra.mxu0 %v84
    %200 = vmatprep.subr.mxu0 0.0
    %201 = vmatpush1.msra.mxu0 %v85
    %202 = vmatprep.subr.mxu0 0.0
    %203 = vmatpush1.msra.mxu0 %v86
    %204 = vmatprep.subr.mxu0 0.0
    %205 = vmatpush1.msra.mxu0 %v87
    %206 = vmatprep.subr.mxu0 0.0
    %207 = vmatpush1.msra.mxu0 %v88
    %208 = vmatprep.subr.mxu0 0.0
    %209 = vmatpush1.msra.mxu0 0.0
    %210 = vmatprep.subr.mxu0 0.0
    %211 = vmatpush1.msra.mxu0 0.0
    %212 = vmatprep.subr.mxu0 0.0
    %213 = vmatpush1.msra.mxu0 0.0
    %214 = vmatprep.subr.mxu0 0.0
    %215 = vmatpush1.msra.mxu0 0.0
    %216 = vmatprep.subr.mxu0 0.0
    %217 = vmatpush1.msra.mxu0 0.0
    %218 = vmatprep.subr.mxu0 0.0
    %219 = vmatpush1.msra.mxu0 0.0
    %220 = vmatprep.subr.mxu0 0.0
    %221 = vmatpush1.msra.mxu0 0.0
    %222 = vmatprep.subr.mxu0 0.0
    %223 = vmatpush1.msra.mxu0 0.0
    %224 = vmatprep.subr.mxu0 0.0
    %225 = vmatpush1.msra.mxu0 0.0
    %226 = vmatprep.subr.mxu0 0.0
    %227 = vmatpush1.msra.mxu0 0.0
    %228 = vmatprep.subr.mxu0 0.0
    %229 = vmatpush1.msra.mxu0 0.0
    %230 = vmatprep.subr.mxu0 0.0
    %231 = vmatpush1.msra.mxu0 0.0
    %232 = vmatprep.subr.mxu0 0.0
    %233 = vmatpush1.msra.mxu0 0.0
    %234 = vmatprep.subr.mxu0 0.0
    %235 = vmatpush1.msra.mxu0 0.0
    %236 = vmatprep.subr.mxu0 0.0
    %237 = vmatpush1.msra.mxu0 0.0
    %238 = vmatprep.subr.mxu0 0.0
    %239 = vmatpush1.msra.mxu0 0.0
    %240 = vmatprep.mubr.f32.mxu0 0.0
    %241 = vmatmul.mubr.f32.gmra.mrb[0].mxu0 %v72
    %v242 = vpop.f32.mrb[0].mxu0
    %v243 = vadd.f32 %v173, %v242
    %v244 = vpop.f32.mrb[0].mxu0
    %245 = vdwg.mxu0
    %v246 = vld [vmem:[%s4] sm:$0x1]
    %v248 = vlaneseq
    %v249 = vshrl.u32 %v248, 7
    %v250 = vsub.s32 0, %v249
    %v251 = vrot.slane %v246, %v250
    %v253 = vadd.f32 %v243, %v251
    %v254 = vmax.f32 %v253, 0.0
    %s255 = scalar_lea.vmem [#allocation8], 128
    %v256 = vld [vmem:[%s255] sm:$0xff]
    %v257 = vld [vmem:[%s255 + $0x8] sm:$0xff]
    %v258 = vld [vmem:[%s255 + $0x10] sm:$0xff]
    %v259 = vld [vmem:[%s255 + $0x18] sm:$0xff]
    %v260 = vld [vmem:[%s255 + $0x20] sm:$0xff]
    %v261 = vld [vmem:[%s255 + $0x28] sm:$0xff]
    %v262 = vld [vmem:[%s255 + $0x30] sm:$0xff]
    %v263 = vld [vmem:[%s255 + $0x38] sm:$0xff]
    %v264 = vld [vmem:[%s255 + $0x40] sm:$0xff]
    %v265 = vld [vmem:[%s255 + $0x48] sm:$0xff]
    %v266 = vld [vmem:[%s255 + $0x50] sm:$0xff]
    %v267 = vld [vmem:[%s255 + $0x58] sm:$0xff]
    %v268 = vld [vmem:[%s255 + $0x60] sm:$0xff]
    %v269 = vld [vmem:[%s255 + $0x68] sm:$0xff]
    %v270 = vld [vmem:[%s255 + $0x70] sm:$0xff]
    %v271 = vld [vmem:[%s255 + $0x78] sm:$0xff]
    %s272 = scalar_lea.vmem %s4, 1
    %v273 = vld [vmem:[%s272] sm:$0x1]
    %v275 = vlaneseq
    %v276 = vshrl.u32 %v275, 7
    %v277 = vsub.s32 0, %v276
    %v278 = vrot.slane %v273, %v277
    %280 = vmatprep.subr.mxu0 0.0
    %281 = vmatpush1.msra.mxu0 %v256
    %282 = vmatprep.subr.mxu0 0.0
    %283 = vmatpush1.msra.mxu0 %v257
    %284 = vmatprep.subr.mxu0 0.0
    %285 = vmatpush1.msra.mxu0 %v258
    %286 = vmatprep.subr.mxu0 0.0
    %287 = vmatpush1.msra.mxu0 %v259
    %288 = vmatprep.subr.mxu0 0.0
    %289 = vmatpush1.msra.mxu0 %v260
    %290 = vmatprep.subr.mxu0 0.0
    %291 = vmatpush1.msra.mxu0 %v261
    %292 = vmatprep.subr.mxu0 0.0
    %293 = vmatpush1.msra.mxu0 %v262
    %294 = vmatprep.subr.mxu0 0.0
    %295 = vmatpush1.msra.mxu0 %v263
    %296 = vmatprep.subr.mxu0 0.0
    %297 = vmatpush1.msra.mxu0 %v264
    %298 = vmatprep.subr.mxu0 0.0
    %299 = vmatpush1.msra.mxu0 %v265
    %300 = vmatprep.subr.mxu0 0.0
    %301 = vmatpush1.msra.mxu0 %v266
    %302 = vmatprep.subr.mxu0 0.0
    %303 = vmatpush1.msra.mxu0 %v267
    %304 = vmatprep.subr.mxu0 0.0
    %305 = vmatpush1.msra.mxu0 %v268
    %306 = vmatprep.subr.mxu0 0.0
    %307 = vmatpush1.msra.mxu0 %v269
    %308 = vmatprep.subr.mxu0 0.0
    %309 = vmatpush1.msra.mxu0 %v270
    %310 = vmatprep.subr.mxu0 0.0
    %311 = vmatpush1.msra.mxu0 %v271
    %312 = vmatprep.subr.mxu0 0.0
    %313 = vmatpush1.msra.mxu0 0.0
    %314 = vmatprep.subr.mxu0 0.0
    %315 = vmatpush1.msra.mxu0 0.0
    %316 = vmatprep.subr.mxu0 0.0
    %317 = vmatpush1.msra.mxu0 0.0
    %318 = vmatprep.subr.mxu0 0.0
    %319 = vmatpush1.msra.mxu0 0.0
    %320 = vmatprep.subr.mxu0 0.0
    %321 = vmatpush1.msra.mxu0 0.0
    %322 = vmatprep.subr.mxu0 0.0
    %323 = vmatpush1.msra.mxu0 0.0
    %324 = vmatprep.subr.mxu0 0.0
    %325 = vmatpush1.msra.mxu0 0.0
    %326 = vmatprep.subr.mxu0 0.0
    %327 = vmatpush1.msra.mxu0 0.0
    %328 = vmatprep.subr.mxu0 0.0
    %329 = vmatpush1.msra.mxu0 0.0
    %330 = vmatprep.subr.mxu0 0.0
    %331 = vmatpush1.msra.mxu0 0.0
    %332 = vmatprep.subr.mxu0 0.0
    %333 = vmatpush1.msra.mxu0 0.0
    %334 = vmatprep.subr.mxu0 0.0
    %335 = vmatpush1.msra.mxu0 0.0
    %336 = vmatprep.subr.mxu0 0.0
    %337 = vmatpush1.msra.mxu0 0.0
    %338 = vmatprep.subr.mxu0 0.0
    %339 = vmatpush1.msra.mxu0 0.0
    %340 = vmatprep.subr.mxu0 0.0
    %341 = vmatpush1.msra.mxu0 0.0
    %342 = vmatprep.subr.mxu0 0.0
    %343 = vmatpush1.msra.mxu0 0.0
    %344 = vmatprep.mubr.f32.mxu0 0.0
    %345 = vmatmul.mubr.f32.gmra.mrb[0].mxu0 %v254
    %v346 = vpop.f32.mrb[0].mxu0
    %v347 = vadd.f32 %v278, %v346
    %v348 = vpop.f32.mrb[0].mxu0
    %349 = vdwg.mxu0
    %v350 = vmax.f32 %v347, 0.0
    %s351 = scalar_lea.vmem [#allocation8], 256
    %v352 = vld [vmem:[%s351] sm:$0xff]
    %v353 = vld [vmem:[%s351 + $0x8] sm:$0xff]
    %v354 = vld [vmem:[%s351 + $0x10] sm:$0xff]
    %v355 = vld [vmem:[%s351 + $0x18] sm:$0xff]
    %v356 = vld [vmem:[%s351 + $0x20] sm:$0xff]
    %v357 = vld [vmem:[%s351 + $0x28] sm:$0xff]
    %v358 = vld [vmem:[%s351 + $0x30] sm:$0xff]
    %v359 = vld [vmem:[%s351 + $0x38] sm:$0xff]
    %v360 = vld [vmem:[%s351 + $0x40] sm:$0xff]
    %v361 = vld [vmem:[%s351 + $0x48] sm:$0xff]
    %v362 = vld [vmem:[%s351 + $0x50] sm:$0xff]
    %v363 = vld [vmem:[%s351 + $0x58] sm:$0xff]
    %v364 = vld [vmem:[%s351 + $0x60] sm:$0xff]
    %v365 = vld [vmem:[%s351 + $0x68] sm:$0xff]
    %v366 = vld [vmem:[%s351 + $0x70] sm:$0xff]
    %v367 = vld [vmem:[%s351 + $0x78] sm:$0xff]
    %368 = vmatprep.subr.mxu0 0.0
    %369 = vmatpush1.msra.mxu0 %v352
    %370 = vmatprep.subr.mxu0 0.0
    %371 = vmatpush1.msra.mxu0 %v353
    %372 = vmatprep.subr.mxu0 0.0
    %373 = vmatpush1.msra.mxu0 %v354
    %374 = vmatprep.subr.mxu0 0.0
    %375 = vmatpush1.msra.mxu0 %v355
    %376 = vmatprep.subr.mxu0 0.0
    %377 = vmatpush1.msra.mxu0 %v356
    %378 = vmatprep.subr.mxu0 0.0
    %379 = vmatpush1.msra.mxu0 %v357
    %380 = vmatprep.subr.mxu0 0.0
    %381 = vmatpush1.msra.mxu0 %v358
    %382 = vmatprep.subr.mxu0 0.0
    %383 = vmatpush1.msra.mxu0 %v359
    %384 = vmatprep.subr.mxu0 0.0
    %385 = vmatpush1.msra.mxu0 %v360
    %386 = vmatprep.subr.mxu0 0.0
    %387 = vmatpush1.msra.mxu0 %v361
    %388 = vmatprep.subr.mxu0 0.0
    %389 = vmatpush1.msra.mxu0 %v362
    %390 = vmatprep.subr.mxu0 0.0
    %391 = vmatpush1.msra.mxu0 %v363
    %392 = vmatprep.subr.mxu0 0.0
    %393 = vmatpush1.msra.mxu0 %v364
    %394 = vmatprep.subr.mxu0 0.0
    %395 = vmatpush1.msra.mxu0 %v365
    %396 = vmatprep.subr.mxu0 0.0
    %397 = vmatpush1.msra.mxu0 %v366
    %398 = vmatprep.subr.mxu0 0.0
    %399 = vmatpush1.msra.mxu0 %v367
    %400 = vmatprep.subr.mxu0 0.0
    %401 = vmatpush1.msra.mxu0 0.0
    %402 = vmatprep.subr.mxu0 0.0
    %403 = vmatpush1.msra.mxu0 0.0
    %404 = vmatprep.subr.mxu0 0.0
    %405 = vmatpush1.msra.mxu0 0.0
    %406 = vmatprep.subr.mxu0 0.0
    %407 = vmatpush1.msra.mxu0 0.0
    %408 = vmatprep.subr.mxu0 0.0
    %409 = vmatpush1.msra.mxu0 0.0
    %410 = vmatprep.subr.mxu0 0.0
    %411 = vmatpush1.msra.mxu0 0.0
    %412 = vmatprep.subr.mxu0 0.0
    %413 = vmatpush1.msra.mxu0 0.0
    %414 = vmatprep.subr.mxu0 0.0
    %415 = vmatpush1.msra.mxu0 0.0
    %416 = vmatprep.subr.mxu0 0.0
    %417 = vmatpush1.msra.mxu0 0.0
    %418 = vmatprep.subr.mxu0 0.0
    %419 = vmatpush1.msra.mxu0 0.0
    %420 = vmatprep.subr.mxu0 0.0
    %421 = vmatpush1.msra.mxu0 0.0
    %422 = vmatprep.subr.mxu0 0.0
    %423 = vmatpush1.msra.mxu0 0.0
    %424 = vmatprep.subr.mxu0 0.0
    %425 = vmatpush1.msra.mxu0 0.0
    %426 = vmatprep.subr.mxu0 0.0
    %427 = vmatpush1.msra.mxu0 0.0
    %428 = vmatprep.subr.mxu0 0.0
    %429 = vmatpush1.msra.mxu0 0.0
    %430 = vmatprep.subr.mxu0 0.0
    %431 = vmatpush1.msra.mxu0 0.0
    %432 = vmatprep.mubr.f32.mxu0 0.0
    %433 = vmatmul.mubr.f32.gmra.mrb[0].mxu0 %v350
    %v434 = vpop.f32.mrb[0].mxu0
    %v435 = vadd.f32 0.0, %v434
    %v436 = vpop.f32.mrb[0].mxu0
    %437 = vdwg.mxu0
    %438 = vst [vmem:[#allocation10] sm:$0xff] %v435
    // Predicated region
    $region38: #{tpu_custom_call.1} parent=1 // pred_check
      _
    $region39: #{tpu_custom_call.1} parent=1 // pred_check_branch
      %440 = sbr.rel (0) target = $region41
    $region40: #{tpu_custom_call.1} parent=1 // pred_region
      %s442 = ssub.s32 128, 128
      %443 = vsyncadd [#allocation4], %s442
      %s445 = sshll.u32 [#allocation10], 4
      %s446 = int_to_ptr.vmem [resolvable:$true] %s445
      %448 = dma.vmem_to_hbm [thread:$0]  %s446, 128, %s5, [#allocation4]
    $region41: #{tpu_custom_call.1} parent=1 // pred_fallthru
      _
    // Predicated region
    $region42: #{tpu_custom_call.1} parent=1 // pred_check
      _
    $region43: #{tpu_custom_call.1} parent=1 // pred_check_branch
      %450 = sbr.rel (0) target = $region45
    $region44: #{tpu_custom_call.1} parent=1 // pred_region
      %451 = dma.done [#allocation4], 128
    $region45: #{tpu_custom_call.1} parent=1 // pred_fallthru
      _
    %452 = vsyncpa [#allocation3], 1
    %453 = vsyncpa [#allocation6], 1
    %454 = vsyncpa [#allocation9], 1
    %455 = vsyncpa [#allocation4], 1

</llo_original>
